<compile_context>
chip_gen: v7x
topology: tpu7x:2x2x1
jax: 0.10.0
libtpu: 0.0.40
codegen_flags: <defaults>
</compile_context>

<pallas_src>
import jax
import jax.numpy as jnp
from jax import lax
from jax.experimental import pallas as pl
from jax.experimental.pallas import tpu as pltpu

EPS = 1e-5
NEG_SLOPE = 0.01  # PyTorch LeakyReLU default


def _round_up(x, m):
    return (x + m - 1) // m * m


# ---------------------------------------------------------------------------
# Pass 1: conv-as-matmul per M tile + per-channel sum / sum-of-squares,
# accumulated into resident [1, C_pad] output blocks.
# ---------------------------------------------------------------------------
def conv_stats_kernel(p_ref, w_ref, y_ref, sum_ref, ssq_ref):
    i = pl.program_id(0)

    @pl.when(i == 0)
    def _():
        sum_ref[...] = jnp.zeros_like(sum_ref)
        ssq_ref[...] = jnp.zeros_like(ssq_ref)

    # Conv on the MXU (bf16 operands, f32 accumulation). The conv bias is
    # intentionally omitted: a bias added before train-mode BatchNorm is
    # removed exactly by the mean-centering, so the module output is unchanged.
    y = jnp.dot(p_ref[...], w_ref[...], preferred_element_type=jnp.float32)
    y_ref[...] = y

    # Channel statistics while the tile is live (sublane reduction -> XLU slot,
    # overlaps the matmul pipeline). Zero-padded rows contribute exactly 0.
    sum_ref[...] += jnp.sum(y, axis=0, keepdims=True)
    ssq_ref[...] += jnp.sum(y * y, axis=0, keepdims=True)


# ---------------------------------------------------------------------------
# Pass 2: fused BatchNorm affine (precomputed per-channel scale/shift) +
# LeakyReLU. Two full-lane VPU passes over each [TM, C_pad] tile.
# ---------------------------------------------------------------------------
def bn_lrelu_kernel(y_ref, scale_ref, shift_ref, o_ref):
    z = y_ref[...] * scale_ref[...] + shift_ref[...]
    o_ref[...] = jnp.where(z >= 0, z, NEG_SLOPE * z)


def im2col_nchw(x, kh=3, kw=3):
    """x: [N, C, H, W] -> patches [N*Ho*Wo, C*kh*kw] (flatten order: c, kh, kw)."""
    # TODO(synk): move patch extraction into the kernel (9 shifted matmuls on a
    # halo'd NHWC block) to avoid materializing this 9x-inflated copy in HBM.
    N, C, H, W = x.shape
    Ho, Wo = H - kh + 1, W - kw + 1
    cols = []
    for i in range(kh):
        for j in range(kw):
            cols.append(x[:, :, i:i + Ho, j:j + Wo])   # [N, C, Ho, Wo]
    p = jnp.stack(cols, axis=0)                        # [kh*kw, N, C, Ho, Wo]
    p = jnp.transpose(p, (1, 3, 4, 2, 0))              # [N, Ho, Wo, C, kh*kw]
    return p.reshape(N * Ho * Wo, C * kh * kw), (N, Ho, Wo)


def conv_block_discriminator(x, weight, bias, gamma, beta, *, tile_m=512):
    """Conv2d(3x3, stride=1, valid) + BatchNorm2d(train mode) + LeakyReLU(0.01).

    x: [N, C_in, H, W] (NCHW, like PyTorch), weight: [C_out, C_in, 3, 3].
    Returns NCHW output of shape [N, C_out, H-2, W-2].
    """
    del bias  # mathematically a no-op before train-mode BN (see kernel comment)
    C_out, C_in, kh, kw = weight.shape
    patches, (N, Ho, Wo) = im2col_nchw(x, kh, kw)
    M, K = patches.shape

    # Pad for dense MXU tiles and unmasked, full-lane loads/stores.
    K_pad = _round_up(K, 128)
    C_pad = _round_up(C_out, 128)
    TM = min(tile_m, _round_up(M, 8))         # rows per tile (multiple of 8)
    M_pad = _round_up(M, TM)
    num_tiles = M_pad // TM

    # bf16 matmul operands (halves DMA bytes of the dominant [M, K] stream);
    # zero padding keeps both the conv result and the BN stats exact.
    p = jnp.zeros((M_pad, K_pad), jnp.bfloat16)
    p = p.at[:M, :K].set(patches.astype(jnp.bfloat16))
    w2d = weight.reshape(C_out, K).T.astype(jnp.bfloat16)        # [K, C_out]
    w = jnp.zeros((K_pad, C_pad), jnp.bfloat16).at[:K, :C_out].set(w2d)

    # Scoped-VMEM budget: double-buffered input/output tiles + weights + headroom.
    est = 2 * (TM * K_pad * 2 + TM * C_pad * 4) + K_pad * C_pad * 2 + 8 * C_pad * 4
    vmem_limit = int(min(max(6 * est, 16 * 2**20), 48 * 2**20))

    cost = pl.CostEstimate(
        flops=2 * M_pad * K_pad * C_pad,
        transcendentals=0,
        bytes_accessed=int(p.size * 2 + w.size * 2 + M_pad * C_pad * 4),
    )

    # ---- Pass 1: conv + channel statistics. The M axis is 'arbitrary' because
    # the stats outputs stay resident (same block index) across the whole grid.
    y_pad, ch_sum, ch_ssq = pl.pallas_call(
        conv_stats_kernel,
        out_shape=(
            jax.ShapeDtypeStruct((M_pad, C_pad), jnp.float32),
            jax.ShapeDtypeStruct((1, C_pad), jnp.float32),
            jax.ShapeDtypeStruct((1, C_pad), jnp.float32),
        ),
        grid_spec=pltpu.PrefetchScalarGridSpec(
            num_scalar_prefetch=0,
            grid=(num_tiles,),
            in_specs=[
                pl.BlockSpec((TM, K_pad), lambda i: (i, 0)),
                pl.BlockSpec((K_pad, C_pad), lambda i: (0, 0)),
            ],
            out_specs=[
                pl.BlockSpec((TM, C_pad), lambda i: (i, 0)),
                pl.BlockSpec((1, C_pad), lambda i: (0, 0)),
                pl.BlockSpec((1, C_pad), lambda i: (0, 0)),
            ],
        ),
        compiler_params=pltpu.CompilerParams(
            dimension_semantics=("arbitrary",),
            vmem_limit_bytes=vmem_limit,
        ),
        cost_estimate=cost,
    )(p, w)

    # ---- Finalize BN stats once on tiny [1, C_pad] vectors (biased variance,
    # eps=1e-5, train mode) and fold gamma/beta into a single scale/shift pair.
    inv_m = jnp.float32(1.0 / M)  # divide by the TRUE M (padded rows are exact 0)
    mean = ch_sum * inv_m
    var = jnp.maximum(ch_ssq * inv_m - mean * mean, 0.0)
    g = jnp.zeros((1, C_pad), jnp.float32).at[0, :C_out].set(gamma.astype(jnp.float32))
    b = jnp.zeros((1, C_pad), jnp.float32).at[0, :C_out].set(beta.astype(jnp.float32))
    scale = g * lax.rsqrt(var + EPS)
    shift = b - mean * scale

    # ---- Pass 2: normalize + LeakyReLU, tiled over M, megacore-parallel.
    out_pad = pl.pallas_call(
        bn_lrelu_kernel,
        out_shape=jax.ShapeDtypeStruct((M_pad, C_pad), jnp.float32),
        grid_spec=pltpu.PrefetchScalarGridSpec(
            num_scalar_prefetch=0,
            grid=(num_tiles,),
            in_specs=[
                pl.BlockSpec((TM, C_pad), lambda i: (i, 0)),
                pl.BlockSpec((1, C_pad), lambda i: (0, 0)),
                pl.BlockSpec((1, C_pad), lambda i: (0, 0)),
            ],
            out_specs=pl.BlockSpec((TM, C_pad), lambda i: (i, 0)),
        ),
        compiler_params=pltpu.CompilerParams(
            dimension_semantics=("parallel",),
            vmem_limit_bytes=vmem_limit,
        ),
    )(y_pad, scale, shift)

    # Strip padding, reshape [M, C_out] -> [N, Ho, Wo, C_out] -> NCHW.
    out = out_pad[:M, :C_out].reshape(N, Ho, Wo, C_out).transpose(0, 3, 1, 2)
    return out


def reference(x, weight, bias, gamma, beta):
    """Pure-JAX f32 reference mirroring the PyTorch forward (training-mode BN)."""
    y = lax.conv_general_dilated(
        x, weight, window_strides=(1, 1), padding="VALID",
        dimension_numbers=("NCHW", "OIHW", "NCHW"),
    ) + bias.reshape(1, -1, 1, 1)
    mean = jnp.mean(y, axis=(0, 2, 3), keepdims=True)
    var = jnp.mean((y - mean) ** 2, axis=(0, 2, 3), keepdims=True)
    y_hat = (y - mean) * lax.rsqrt(var + EPS)
    z = gamma.reshape(1, -1, 1, 1) * y_hat + beta.reshape(1, -1, 1, 1)
    return jnp.where(z >= 0, z, NEG_SLOPE * z)


if __name__ == "__main__":
    # Small shapes consistent with the module (stride=1, 3x3 conv, BN, LeakyReLU).
    N, C_in, C_out, H, W = 2, 8, 16, 16, 16

    key = jax.random.PRNGKey(0)
    kx, kw_, kb, kg, kbeta = jax.random.split(key, 5)

    x = jax.random.normal(kx, (N, C_in, H, W), dtype=jnp.float32)
    weight = jax.random.normal(kw_, (C_out, C_in, 3, 3), dtype=jnp.float32) * 0.1
    bias = jax.random.normal(kb, (C_out,), dtype=jnp.float32) * 0.1
    gamma = jnp.ones((C_out,), dtype=jnp.float32) + 0.1 * jax.random.normal(kg, (C_out,))
    beta = 0.1 * jax.random.normal(kbeta, (C_out,), dtype=jnp.float32)

    out = jax.block_until_ready(conv_block_discriminator(x, weight, bias, gamma, beta))
    assert out.shape == (N, C_out, H - 2, W - 2), out.shape

    # (1) True-f32 module reference; loose tolerance accounts for the bf16 MXU
    #     operands used in the kernel's conv matmul.
    ref_f32 = jax.block_until_ready(reference(x, weight, bias, gamma, beta))
    err_f32 = float(jnp.max(jnp.abs(out - ref_f32)))
    assert jnp.allclose(out, ref_f32, atol=5e-2, rtol=5e-2), err_f32

    # (2) Precision-matched reference (inputs rounded to bf16, f32 accumulation):
    #     verifies the kernel/BN/LeakyReLU logic itself to tight tolerance.
    xb = x.astype(jnp.bfloat16).astype(jnp.float32)
    wb = weight.astype(jnp.bfloat16).astype(jnp.float32)
    ref_bf = jax.block_until_ready(reference(xb, wb, bias, gamma, beta))
    err_bf = float(jnp.max(jnp.abs(out - ref_bf)))
    assert jnp.allclose(out, ref_bf, atol=1e-3, rtol=1e-3), err_bf

    print("KERNEL_OK")
</pallas_src>

<mosaic_0001>
module attributes {stable_mosaic.version = 11 : i64} {
  func.func @conv_stats_kernel(%arg0: i32, %arg1: memref<392x128xbf16, #tpu.memory_space<vmem>>, %arg2: memref<128x128xbf16, #tpu.memory_space<vmem>>, %arg3: memref<392x128xf32, #tpu.memory_space<vmem>>, %arg4: memref<1x128xf32, #tpu.memory_space<vmem>>, %arg5: memref<1x128xf32, #tpu.memory_space<vmem>>) attributes {dimension_semantics = [#tpu.dimension_semantics<arbitrary>], iteration_bounds = array<i64: 1>, scalar_prefetch = 0 : i64, scratch_operands = 0 : i64, tpu.core_type = #tpu.core_type<tc>, window_params = [{transform_indices = @transform_0, window_bounds = array<i64: 392, 128>}, {pipeline_mode = #tpu.pipeline_mode<synchronous>, transform_indices = @transform_1, window_bounds = array<i64: 128, 128>}, {transform_indices = @transform_2, window_bounds = array<i64: 392, 128>}, {pipeline_mode = #tpu.pipeline_mode<synchronous>, transform_indices = @transform_3, window_bounds = array<i64: 1, 128>}, {pipeline_mode = #tpu.pipeline_mode<synchronous>, transform_indices = @transform_4, window_bounds = array<i64: 1, 128>}]} {
    %c0_i32 = arith.constant 0 : i32
    %0 = arith.cmpi eq, %arg0, %c0_i32 : i32
    %1 = arith.extui %0 : i1 to i32
    %c0_i32_0 = arith.constant 0 : i32
    %2 = arith.cmpi ne, %1, %c0_i32_0 : i32
    scf.if %2 {
      %cst_16 = arith.constant 0.000000e+00 : f32
      %18 = vector.broadcast %cst_16 : f32 to vector<1x128xf32>
      %c0_17 = arith.constant 0 : index
      %c0_18 = arith.constant 0 : index
      %19 = vector.load %arg4[%c0_17, %c0_18] : memref<1x128xf32, #tpu.memory_space<vmem>>, vector<1x128xf32>
      tpu.vector_store %arg4[%c0_17, %c0_18], %18 {strides = array<i32>} : memref<1x128xf32, #tpu.memory_space<vmem>>, vector<1x128xf32>,
      %cst_19 = arith.constant 0.000000e+00 : f32
      %20 = vector.broadcast %cst_19 : f32 to vector<1x128xf32>
      %c0_20 = arith.constant 0 : index
      %c0_21 = arith.constant 0 : index
      %21 = vector.load %arg5[%c0_20, %c0_21] : memref<1x128xf32, #tpu.memory_space<vmem>>, vector<1x128xf32>
      tpu.vector_store %arg5[%c0_20, %c0_21], %20 {strides = array<i32>} : memref<1x128xf32, #tpu.memory_space<vmem>>, vector<1x128xf32>,
    } else {
    }
    %c0 = arith.constant 0 : index
    %c0_1 = arith.constant 0 : index
    %3 = vector.load %arg1[%c0, %c0_1] : memref<392x128xbf16, #tpu.memory_space<vmem>>, vector<392x128xbf16>
    %c0_2 = arith.constant 0 : index
    %c0_3 = arith.constant 0 : index
    %4 = vector.load %arg2[%c0_2, %c0_3] : memref<128x128xbf16, #tpu.memory_space<vmem>>, vector<128x128xbf16>
    %cst = arith.constant dense<0.000000e+00> : vector<392x128xf32>
    %5 = tpu.matmul %3, %4, %cst {dimension_numbers = #tpu.dot_dimension_numbers<[1], [0], [0], [1], [0, 0, 1, 1], [], []>} : vector<392x128xbf16>, vector<128x128xbf16>, vector<392x128xf32> -> vector<392x128xf32>
    %c0_4 = arith.constant 0 : index
    %c0_5 = arith.constant 0 : index
    %6 = vector.load %arg3[%c0_4, %c0_5] : memref<392x128xf32, #tpu.memory_space<vmem>>, vector<392x128xf32>
    tpu.vector_store %arg3[%c0_4, %c0_5], %5 {strides = array<i32>} : memref<392x128xf32, #tpu.memory_space<vmem>>, vector<392x128xf32>,
    %c0_6 = arith.constant 0 : index
    %c0_7 = arith.constant 0 : index
    %7 = vector.load %arg4[%c0_6, %c0_7] : memref<1x128xf32, #tpu.memory_space<vmem>>, vector<1x128xf32>
    %cst_8 = arith.constant dense<0.000000e+00> : vector<128xf32>
    %8 = vector.multi_reduction <add>, %5, %cst_8 [0] : vector<392x128xf32> to vector<128xf32>
    %9 = vector.shape_cast %8 : vector<128xf32> to vector<1x128xf32>
    %10 = arith.addf %7, %9 : vector<1x128xf32>
    %c0_9 = arith.constant 0 : index
    %c0_10 = arith.constant 0 : index
    %11 = vector.load %arg4[%c0_9, %c0_10] : memref<1x128xf32, #tpu.memory_space<vmem>>, vector<1x128xf32>
    tpu.vector_store %arg4[%c0_9, %c0_10], %10 {strides = array<i32>} : memref<1x128xf32, #tpu.memory_space<vmem>>, vector<1x128xf32>,
    %c0_11 = arith.constant 0 : index
    %c0_12 = arith.constant 0 : index
    %12 = vector.load %arg5[%c0_11, %c0_12] : memref<1x128xf32, #tpu.memory_space<vmem>>, vector<1x128xf32>
    %13 = arith.mulf %5, %5 : vector<392x128xf32>
    %cst_13 = arith.constant dense<0.000000e+00> : vector<128xf32>
    %14 = vector.multi_reduction <add>, %13, %cst_13 [0] : vector<392x128xf32> to vector<128xf32>
    %15 = vector.shape_cast %14 : vector<128xf32> to vector<1x128xf32>
    %16 = arith.addf %12, %15 : vector<1x128xf32>
    %c0_14 = arith.constant 0 : index
    %c0_15 = arith.constant 0 : index
    %17 = vector.load %arg5[%c0_14, %c0_15] : memref<1x128xf32, #tpu.memory_space<vmem>>, vector<1x128xf32>
    tpu.vector_store %arg5[%c0_14, %c0_15], %16 {strides = array<i32>} : memref<1x128xf32, #tpu.memory_space<vmem>>, vector<1x128xf32>,
    return
  }
  func.func @transform_0(%arg0: i32) -> (i32, i32) {
    %c0_i32 = arith.constant 0 : i32
    %c0_i32_0 = arith.constant 0 : i32
    return %arg0, %c0_i32 : i32, i32
  }
  func.func @transform_1(%arg0: i32) -> (i32, i32) {
    %c0_i32 = arith.constant 0 : i32
    %c0_i32_0 = arith.constant 0 : i32
    %c0_i32_1 = arith.constant 0 : i32
    return %c0_i32, %c0_i32_0 : i32, i32
  }
  func.func @transform_2(%arg0: i32) -> (i32, i32) {
    %c0_i32 = arith.constant 0 : i32
    %c0_i32_0 = arith.constant 0 : i32
    return %arg0, %c0_i32 : i32, i32
  }
  func.func @transform_3(%arg0: i32) -> (i32, i32) {
    %c0_i32 = arith.constant 0 : i32
    %c0_i32_0 = arith.constant 0 : i32
    %c0_i32_1 = arith.constant 0 : i32
    return %c0_i32, %c0_i32_0 : i32, i32
  }
  func.func @transform_4(%arg0: i32) -> (i32, i32) {
    %c0_i32 = arith.constant 0 : i32
    %c0_i32_0 = arith.constant 0 : i32
    %c0_i32_1 = arith.constant 0 : i32
    return %c0_i32, %c0_i32_0 : i32, i32
  }
}

</mosaic_0001>

<llo_original>
// kernel: tpu_custom_call.1
$region0: #{tpu_custom_call.1}
  #allocation0 [shape = 'u32[]', space=smem, size = 0x4, offset = 0x4, fixed_abs, tag = 'smem constant byte address 0x4 - core index']
  #allocation1 [shape = 'u32[144,128]{1,0:T(1,128)}', space=vmem, size = 0x12000, scoped, tag = 'internal scratch']
  %s0 = inlined_call_operand.hbm [shape: bf16[392,128], index: 0, kind: input, shape index: {}]
  %s1 = inlined_call_operand.hbm [shape: bf16[128,128], index: 1, kind: input, shape index: {}]
  %s2 = inlined_call_operand.hbm [shape: f32[392,128], index: 2, kind: output, shape index: {0}]
  %s3 = inlined_call_operand.hbm [shape: f32[1,128], index: 3, kind: output, shape index: {1}]
  %s4 = inlined_call_operand.hbm [shape: f32[1,128], index: 4, kind: output, shape index: {2}]
  %5 = xla_tuple %s2, %s3, %s4
  %s6 = sld [smem:[#allocation0]]
  $region46: #{tpu_custom_call.1} parent=0
    _
  %s8 = ssub.s32 1, %s6
  %s9 = scalar_select 0, %s8, %s6
  $region1: #{tpu_custom_call.1} parent=0
    #allocation2 [shape = 'u8[100352]{0}', space=vmem, size = 0x18800, scoped, tag = 'input window, operand 0, single buffered']
    #allocation3 [shape = 's32[1]{0}', space=sflag, size = 0x4, scoped, tag = 'scoped memory for tpu_custom_call.1']
    #allocation4 [shape = 's32[1]{0}', space=sflag, size = 0x4, scoped, tag = 'scoped memory for tpu_custom_call.1']
    #allocation5 [shape = 'u8[32768]{0}', space=vmem, size = 0x8000, scoped, tag = 'input window, operand 1, single buffered']
    #allocation6 [shape = 's32[1]{0}', space=sflag, size = 0x4, scoped, tag = 'scoped memory for tpu_custom_call.1']
    #allocation7 [shape = 'u8[200704]{0}', space=vmem, size = 0x31000, scoped, tag = 'output window, operand 0, single buffered']
    #allocation8 [shape = 'u8[512]{0}', space=vmem, size = 0x400, scoped, tag = 'output window, operand 1, single buffered']
    #allocation9 [shape = 's32[1]{0}', space=sflag, size = 0x4, scoped, tag = 'scoped memory for tpu_custom_call.1']
    #allocation10 [shape = 'u8[512]{0}', space=vmem, size = 0x400, scoped, tag = 'output window, operand 2, single buffered']
    %10 = vsyncpa [#allocation3], 0
    %11 = vsyncpa [#allocation6], 0
    %12 = vsyncpa [#allocation4], 0
    %13 = vsyncpa [#allocation9], 0
    // Predicated region
    $region2: #{tpu_custom_call.1} parent=1 // pred_check
      _
    $region3: #{tpu_custom_call.1} parent=1 // pred_check_branch
      %15 = sbr.rel (0) target = $region5
    $region4: #{tpu_custom_call.1} parent=1 // pred_region
      %s17 = ssub.s32 3136, 3136
      %18 = vsyncadd [#allocation3], %s17
      %s19 = sshll.u32 [#allocation2], 4
      %s20 = int_to_ptr.vmem [resolvable:$true] %s19
      %25 = dma.hbm_to_vmem [thread:$0]  %s0, 3136, %s20, [#allocation3], 64, 64, 4
    $region5: #{tpu_custom_call.1} parent=1 // pred_fallthru
      _
    // Predicated region
    $region6: #{tpu_custom_call.1} parent=1 // pred_check
      _
    $region7: #{tpu_custom_call.1} parent=1 // pred_check_branch
      %27 = sbr.rel (0) target = $region9
    $region8: #{tpu_custom_call.1} parent=1 // pred_region
      %s29 = ssub.s32 1024, 1024
      %30 = vsyncadd [#allocation6], %s29
      %s31 = sshll.u32 [#allocation5], 4
      %s32 = int_to_ptr.vmem [resolvable:$true] %s31
      %37 = dma.hbm_to_vmem [thread:$0]  %s1, 1024, %s32, [#allocation6], 64, 64, 4
    $region9: #{tpu_custom_call.1} parent=1 // pred_fallthru
      _
    // Predicated region
    $region10: #{tpu_custom_call.1} parent=1 // pred_check
      _
    $region11: #{tpu_custom_call.1} parent=1 // pred_check_branch
      %39 = sbr.rel (0) target = $region13
    $region12: #{tpu_custom_call.1} parent=1 // pred_region
      %40 = dma.done [#allocation3], 3136
    $region13: #{tpu_custom_call.1} parent=1 // pred_fallthru
      _
    // Predicated region
    $region14: #{tpu_custom_call.1} parent=1 // pred_check
      _
    $region15: #{tpu_custom_call.1} parent=1 // pred_check_branch
      %42 = sbr.rel (0) target = $region17
    $region16: #{tpu_custom_call.1} parent=1 // pred_region
      %43 = dma.done [#allocation6], 1024
    $region17: #{tpu_custom_call.1} parent=1 // pred_fallthru
      _
    %p45 = scmp.eq.s32.totalorder 0, 0
    // Predicated region
    $region18: #{tpu_custom_call.1} parent=1 // pred_check
      %p46 = pneg %p45
    $region19: #{tpu_custom_call.1} parent=1 // pred_check_branch
      %48 = sbr.rel (%p46) target = $region21
    $region20: #{tpu_custom_call.1} parent=1 // pred_region
      %49 = vst [vmem:[#allocation8] sm:$0x1] 0.0
      %50 = vst [vmem:[#allocation10] sm:$0x1] 0.0
    $region21: #{tpu_custom_call.1} parent=1 // pred_fallthru
      _
    %v51 = vld [vmem:[#allocation2] sm:$0xf]
    %v52 = vld [vmem:[#allocation2 + $0x4] sm:$0xf]
    %v53 = vld [vmem:[#allocation2 + $0x8] sm:$0xf]
    %v54 = vld [vmem:[#allocation2 + $0xc] sm:$0xf]
    %v55 = vld [vmem:[#allocation2 + $0x10] sm:$0xf]
    %v56 = vld [vmem:[#allocation2 + $0x14] sm:$0xf]
    %v57 = vld [vmem:[#allocation2 + $0x18] sm:$0xf]
    %v58 = vld [vmem:[#allocation2 + $0x1c] sm:$0xf]
    %v59 = vld [vmem:[#allocation2 + $0x20] sm:$0xf]
    %v60 = vld [vmem:[#allocation2 + $0x24] sm:$0xf]
    %v61 = vld [vmem:[#allocation2 + $0x28] sm:$0xf]
    %v62 = vld [vmem:[#allocation2 + $0x2c] sm:$0xf]
    %v63 = vld [vmem:[#allocation2 + $0x30] sm:$0xf]
    %v64 = vld [vmem:[#allocation2 + $0x34] sm:$0xf]
    %v65 = vld [vmem:[#allocation2 + $0x38] sm:$0xf]
    %v66 = vld [vmem:[#allocation2 + $0x3c] sm:$0xf]
    %v67 = vld [vmem:[#allocation2 + $0x40] sm:$0xf]
    %v68 = vld [vmem:[#allocation2 + $0x44] sm:$0xf]
    %v69 = vld [vmem:[#allocation2 + $0x48] sm:$0xf]
    %v70 = vld [vmem:[#allocation2 + $0x4c] sm:$0xf]
    %v71 = vld [vmem:[#allocation2 + $0x50] sm:$0xf]
    %v72 = vld [vmem:[#allocation2 + $0x54] sm:$0xf]
    %v73 = vld [vmem:[#allocation2 + $0x58] sm:$0xf]
    %v74 = vld [vmem:[#allocation2 + $0x5c] sm:$0xf]
    %v75 = vld [vmem:[#allocation2 + $0x60] sm:$0xf]
    %v76 = vld [vmem:[#allocation2 + $0x64] sm:$0xf]
    %v77 = vld [vmem:[#allocation2 + $0x68] sm:$0xf]
    %v78 = vld [vmem:[#allocation2 + $0x6c] sm:$0xf]
    %v79 = vld [vmem:[#allocation2 + $0x70] sm:$0xf]
    %v80 = vld [vmem:[#allocation2 + $0x74] sm:$0xf]
    %v81 = vld [vmem:[#allocation2 + $0x78] sm:$0xf]
    %v82 = vld [vmem:[#allocation2 + $0x7c] sm:$0xf]
    %v83 = vld [vmem:[#allocation2 + $0x80] sm:$0xf]
    %v84 = vld [vmem:[#allocation2 + $0x84] sm:$0xf]
    %v85 = vld [vmem:[#allocation2 + $0x88] sm:$0xf]
    %v86 = vld [vmem:[#allocation2 + $0x8c] sm:$0xf]
    %v87 = vld [vmem:[#allocation2 + $0x90] sm:$0xf]
    %v88 = vld [vmem:[#allocation2 + $0x94] sm:$0xf]
    %v89 = vld [vmem:[#allocation2 + $0x98] sm:$0xf]
    %v90 = vld [vmem:[#allocation2 + $0x9c] sm:$0xf]
    %v91 = vld [vmem:[#allocation2 + $0xa0] sm:$0xf]
    %v92 = vld [vmem:[#allocation2 + $0xa4] sm:$0xf]
    %v93 = vld [vmem:[#allocation2 + $0xa8] sm:$0xf]
    %v94 = vld [vmem:[#allocation2 + $0xac] sm:$0xf]
    %v95 = vld [vmem:[#allocation2 + $0xb0] sm:$0xf]
    %v96 = vld [vmem:[#allocation2 + $0xb4] sm:$0xf]
    %v97 = vld [vmem:[#allocation2 + $0xb8] sm:$0xf]
    %v98 = vld [vmem:[#allocation2 + $0xbc] sm:$0xf]
    %v99 = vld [vmem:[#allocation2 + $0xc0] sm:$0xf]
    %v100 = vld [vmem:[#allocation5] sm:$0xf]
    %v101 = vld [vmem:[#allocation5 + $0x4] sm:$0xf]
    %v102 = vld [vmem:[#allocation5 + $0x8] sm:$0xf]
    %v103 = vld [vmem:[#allocation5 + $0xc] sm:$0xf]
    %v104 = vld [vmem:[#allocation5 + $0x10] sm:$0xf]
    %v105 = vld [vmem:[#allocation5 + $0x14] sm:$0xf]
    %v106 = vld [vmem:[#allocation5 + $0x18] sm:$0xf]
    %v107 = vld [vmem:[#allocation5 + $0x1c] sm:$0xf]
    %v108 = vld [vmem:[#allocation5 + $0x20] sm:$0xf]
    %v109 = vld [vmem:[#allocation5 + $0x24] sm:$0xf]
    %v110 = vld [vmem:[#allocation5 + $0x28] sm:$0xf]
    %v111 = vld [vmem:[#allocation5 + $0x2c] sm:$0xf]
    %v112 = vld [vmem:[#allocation5 + $0x30] sm:$0xf]
    %v113 = vld [vmem:[#allocation5 + $0x34] sm:$0xf]
    %v114 = vld [vmem:[#allocation5 + $0x38] sm:$0xf]
    %v115 = vld [vmem:[#allocation5 + $0x3c] sm:$0xf]
    %v165 = vunpack.c.l.b16 %v51
    %v166 = vunpack.c.l.b16 %v52
    %v167 = vunpack.c.l.b16 %v53
    %v168 = vunpack.c.l.b16 %v54
    %v169 = vunpack.c.l.b16 %v55
    %v170 = vunpack.c.l.b16 %v56
    %v171 = vunpack.c.l.b16 %v57
    %v172 = vunpack.c.l.b16 %v58
    %v173 = vunpack.c.l.b16 %v59
    %v174 = vunpack.c.l.b16 %v60
    %v175 = vunpack.c.l.b16 %v61
    %v176 = vunpack.c.l.b16 %v62
    %v177 = vunpack.c.l.b16 %v63
    %v178 = vunpack.c.l.b16 %v64
    %v179 = vunpack.c.l.b16 %v65
    %v180 = vunpack.c.l.b16 %v66
    %v181 = vunpack.c.l.b16 %v67
    %v182 = vunpack.c.l.b16 %v68
    %v183 = vunpack.c.l.b16 %v69
    %v184 = vunpack.c.l.b16 %v70
    %v185 = vunpack.c.l.b16 %v71
    %v186 = vunpack.c.l.b16 %v72
    %v187 = vunpack.c.l.b16 %v73
    %v188 = vunpack.c.l.b16 %v74
    %v189 = vunpack.c.l.b16 %v75
    %v190 = vunpack.c.l.b16 %v76
    %v191 = vunpack.c.l.b16 %v77
    %v192 = vunpack.c.l.b16 %v78
    %v193 = vunpack.c.l.b16 %v79
    %v194 = vunpack.c.l.b16 %v80
    %v195 = vunpack.c.l.b16 %v81
    %v196 = vunpack.c.l.b16 %v82
    %v197 = vunpack.c.l.b16 %v83
    %v198 = vunpack.c.l.b16 %v84
    %v199 = vunpack.c.l.b16 %v85
    %v200 = vunpack.c.l.b16 %v86
    %v201 = vunpack.c.l.b16 %v87
    %v202 = vunpack.c.l.b16 %v88
    %v203 = vunpack.c.l.b16 %v89
    %v204 = vunpack.c.l.b16 %v90
    %v205 = vunpack.c.l.b16 %v91
    %v206 = vunpack.c.l.b16 %v92
    %v207 = vunpack.c.l.b16 %v93
    %v208 = vunpack.c.l.b16 %v94
    %v209 = vunpack.c.l.b16 %v95
    %v210 = vunpack.c.l.b16 %v96
    %v211 = vunpack.c.l.b16 %v97
    %v212 = vunpack.c.l.b16 %v98
    %v213 = vunpack.c.l.b16 %v99
    %v214 = vpack.c.b16 %v166, %v165
    %v215 = vpack.c.b16 %v168, %v167
    %v216 = vpack.c.b16 %v170, %v169
    %v217 = vpack.c.b16 %v172, %v171
    %v218 = vpack.c.b16 %v174, %v173
    %v219 = vpack.c.b16 %v176, %v175
    %v220 = vpack.c.b16 %v178, %v177
    %v221 = vpack.c.b16 %v180, %v179
    %v222 = vpack.c.b16 %v182, %v181
    %v223 = vpack.c.b16 %v184, %v183
    %v224 = vpack.c.b16 %v186, %v185
    %v225 = vpack.c.b16 %v188, %v187
    %v226 = vpack.c.b16 %v190, %v189
    %v227 = vpack.c.b16 %v192, %v191
    %v228 = vpack.c.b16 %v194, %v193
    %v229 = vpack.c.b16 %v196, %v195
    %v230 = vpack.c.b16 %v198, %v197
    %v231 = vpack.c.b16 %v200, %v199
    %v232 = vpack.c.b16 %v202, %v201
    %v233 = vpack.c.b16 %v204, %v203
    %v234 = vpack.c.b16 %v206, %v205
    %v235 = vpack.c.b16 %v208, %v207
    %v236 = vpack.c.b16 %v210, %v209
    %v237 = vpack.c.b16 %v212, %v211
    %v238 = vpack.c.b16 %v213, %v213
    %v280 = vunpack.c.l.b16 %v100
    %v281 = vunpack.c.l.b16 %v101
    %v282 = vunpack.c.l.b16 %v102
    %v283 = vunpack.c.l.b16 %v103
    %v284 = vunpack.c.l.b16 %v104
    %v285 = vunpack.c.l.b16 %v105
    %v286 = vunpack.c.l.b16 %v106
    %v287 = vunpack.c.l.b16 %v107
    %v288 = vunpack.c.l.b16 %v108
    %v289 = vunpack.c.l.b16 %v109
    %v290 = vunpack.c.l.b16 %v110
    %v291 = vunpack.c.l.b16 %v111
    %v292 = vunpack.c.l.b16 %v112
    %v293 = vunpack.c.l.b16 %v113
    %v294 = vunpack.c.l.b16 %v114
    %v295 = vunpack.c.l.b16 %v115
    %v296 = vpack.c.b16 %v281, %v280
    %v297 = vpack.c.b16 %v283, %v282
    %v298 = vpack.c.b16 %v285, %v284
    %v299 = vpack.c.b16 %v287, %v286
    %v300 = vpack.c.b16 %v289, %v288
    %v301 = vpack.c.b16 %v291, %v290
    %v302 = vpack.c.b16 %v293, %v292
    %v303 = vpack.c.b16 %v295, %v294
    %312 = vmatprep.subr.bf16.mxu0 0
    %313 = vmatpush1.bf16.msra.mxu0 %v296
    %314 = vmatprep.subr.bf16.mxu0 0
    %315 = vmatpush1.bf16.msra.mxu0 %v297
    %316 = vmatprep.subr.bf16.mxu0 0
    %317 = vmatpush1.bf16.msra.mxu0 %v298
    %318 = vmatprep.subr.bf16.mxu0 0
    %319 = vmatpush1.bf16.msra.mxu0 %v299
    %320 = vmatprep.subr.bf16.mxu0 0
    %321 = vmatpush1.bf16.msra.mxu0 %v300
    %322 = vmatprep.subr.bf16.mxu0 0
    %323 = vmatpush1.bf16.msra.mxu0 %v301
    %324 = vmatprep.subr.bf16.mxu0 0
    %325 = vmatpush1.bf16.msra.mxu0 %v302
    %326 = vmatprep.subr.bf16.mxu0 0
    %327 = vmatpush1.bf16.msra.mxu0 %v303
    %328 = vmatprep.subr.bf16.mxu0 0
    %329 = vmatpush1.bf16.msra.mxu0 0
    %330 = vmatprep.subr.bf16.mxu0 0
    %331 = vmatpush1.bf16.msra.mxu0 0
    %332 = vmatprep.subr.bf16.mxu0 0
    %333 = vmatpush1.bf16.msra.mxu0 0
    %334 = vmatprep.subr.bf16.mxu0 0
    %335 = vmatpush1.bf16.msra.mxu0 0
    %336 = vmatprep.subr.bf16.mxu0 0
    %337 = vmatpush1.bf16.msra.mxu0 0
    %338 = vmatprep.subr.bf16.mxu0 0
    %339 = vmatpush1.bf16.msra.mxu0 0
    %340 = vmatprep.subr.bf16.mxu0 0
    %341 = vmatpush1.bf16.msra.mxu0 0
    %342 = vmatprep.subr.bf16.mxu0 0
    %343 = vmatpush1.bf16.msra.mxu0 0
    %344 = vmatprep.mubr.bf16.mxu0 0
    %345 = vmatmul.mubr.bf16.gmra.mrb[0].mxu0 %v214
    %v346 = vpop.f32.mrb[0].mxu0
    %v347 = vadd.f32 0.0, %v346
    %v348 = vpop.f32.mrb[0].mxu0
    %v349 = vpop.f32.mrb[0].mxu0
    %v350 = vadd.f32 0.0, %v349
    %v351 = vpop.f32.mrb[0].mxu0
    %352 = vmatprep.mubr.bf16.mxu0 0
    %353 = vmatmul.mubr.bf16.gmra.mrb[0].mxu0 %v215
    %v354 = vpop.f32.mrb[0].mxu0
    %v355 = vadd.f32 0.0, %v354
    %v356 = vpop.f32.mrb[0].mxu0
    %v357 = vpop.f32.mrb[0].mxu0
    %v358 = vadd.f32 0.0, %v357
    %v359 = vpop.f32.mrb[0].mxu0
    %360 = vmatprep.mubr.bf16.mxu0 0
    %361 = vmatmul.mubr.bf16.gmra.mrb[0].mxu0 %v216
    %v362 = vpop.f32.mrb[0].mxu0
    %v363 = vadd.f32 0.0, %v362
    %v364 = vpop.f32.mrb[0].mxu0
    %v365 = vpop.f32.mrb[0].mxu0
    %v366 = vadd.f32 0.0, %v365
    %v367 = vpop.f32.mrb[0].mxu0
    %368 = vmatprep.mubr.bf16.mxu0 0
    %369 = vmatmul.mubr.bf16.gmra.mrb[0].mxu0 %v217
    %v370 = vpop.f32.mrb[0].mxu0
    %v371 = vadd.f32 0.0, %v370
    %v372 = vpop.f32.mrb[0].mxu0
    %v373 = vpop.f32.mrb[0].mxu0
    %v374 = vadd.f32 0.0, %v373
    %v375 = vpop.f32.mrb[0].mxu0
    %376 = vmatprep.mubr.bf16.mxu0 0
    %377 = vmatmul.mubr.bf16.gmra.mrb[0].mxu0 %v218
    %v378 = vpop.f32.mrb[0].mxu0
    %v379 = vadd.f32 0.0, %v378
    %v380 = vpop.f32.mrb[0].mxu0
    %v381 = vpop.f32.mrb[0].mxu0
    %v382 = vadd.f32 0.0, %v381
    %v383 = vpop.f32.mrb[0].mxu0
    %384 = vmatprep.mubr.bf16.mxu0 0
    %385 = vmatmul.mubr.bf16.gmra.mrb[0].mxu0 %v219
    %v386 = vpop.f32.mrb[0].mxu0
    %v387 = vadd.f32 0.0, %v386
    %v388 = vpop.f32.mrb[0].mxu0
    %v389 = vpop.f32.mrb[0].mxu0
    %v390 = vadd.f32 0.0, %v389
    %v391 = vpop.f32.mrb[0].mxu0
    %392 = vmatprep.mubr.bf16.mxu0 0
    %393 = vmatmul.mubr.bf16.gmra.mrb[0].mxu0 %v220
    %v394 = vpop.f32.mrb[0].mxu0
    %v395 = vadd.f32 0.0, %v394
    %v396 = vpop.f32.mrb[0].mxu0
    %v397 = vpop.f32.mrb[0].mxu0
    %v398 = vadd.f32 0.0, %v397
    %v399 = vpop.f32.mrb[0].mxu0
    %400 = vmatprep.mubr.bf16.mxu0 0
    %401 = vmatmul.mubr.bf16.gmra.mrb[0].mxu0 %v221
    %v402 = vpop.f32.mrb[0].mxu0
    %v403 = vadd.f32 0.0, %v402
    %v404 = vpop.f32.mrb[0].mxu0
    %v405 = vpop.f32.mrb[0].mxu0
    %v406 = vadd.f32 0.0, %v405
    %v407 = vpop.f32.mrb[0].mxu0
    %408 = vmatprep.mubr.bf16.mxu0 0
    %409 = vmatmul.mubr.bf16.gmra.mrb[0].mxu0 %v222
    %v410 = vpop.f32.mrb[0].mxu0
    %v411 = vadd.f32 0.0, %v410
    %v412 = vpop.f32.mrb[0].mxu0
    %v413 = vpop.f32.mrb[0].mxu0
    %v414 = vadd.f32 0.0, %v413
    %v415 = vpop.f32.mrb[0].mxu0
    %416 = vmatprep.mubr.bf16.mxu0 0
    %417 = vmatmul.mubr.bf16.gmra.mrb[0].mxu0 %v223
    %v418 = vpop.f32.mrb[0].mxu0
    %v419 = vadd.f32 0.0, %v418
    %v420 = vpop.f32.mrb[0].mxu0
    %v421 = vpop.f32.mrb[0].mxu0
    %v422 = vadd.f32 0.0, %v421
    %v423 = vpop.f32.mrb[0].mxu0
    %424 = vmatprep.mubr.bf16.mxu0 0
    %425 = vmatmul.mubr.bf16.gmra.mrb[0].mxu0 %v224
    %v426 = vpop.f32.mrb[0].mxu0
    %v427 = vadd.f32 0.0, %v426
    %v428 = vpop.f32.mrb[0].mxu0
    %v429 = vpop.f32.mrb[0].mxu0
    %v430 = vadd.f32 0.0, %v429
    %v431 = vpop.f32.mrb[0].mxu0
    %432 = vmatprep.mubr.bf16.mxu0 0
    %433 = vmatmul.mubr.bf16.gmra.mrb[0].mxu0 %v225
    %v434 = vpop.f32.mrb[0].mxu0
    %v435 = vadd.f32 0.0, %v434
    %v436 = vpop.f32.mrb[0].mxu0
    %v437 = vpop.f32.mrb[0].mxu0
    %v438 = vadd.f32 0.0, %v437
    %v439 = vpop.f32.mrb[0].mxu0
    %440 = vmatprep.mubr.bf16.mxu0 0
    %441 = vmatmul.mubr.bf16.gmra.mrb[0].mxu0 %v226
    %v442 = vpop.f32.mrb[0].mxu0
    %v443 = vadd.f32 0.0, %v442
    %v444 = vpop.f32.mrb[0].mxu0
    %v445 = vpop.f32.mrb[0].mxu0
    %v446 = vadd.f32 0.0, %v445
    %v447 = vpop.f32.mrb[0].mxu0
    %448 = vmatprep.mubr.bf16.mxu0 0
    %449 = vmatmul.mubr.bf16.gmra.mrb[0].mxu0 %v227
    %v450 = vpop.f32.mrb[0].mxu0
    %v451 = vadd.f32 0.0, %v450
    %v452 = vpop.f32.mrb[0].mxu0
    %v453 = vpop.f32.mrb[0].mxu0
    %v454 = vadd.f32 0.0, %v453
    %v455 = vpop.f32.mrb[0].mxu0
    %456 = vmatprep.mubr.bf16.mxu0 0
    %457 = vmatmul.mubr.bf16.gmra.mrb[0].mxu0 %v228
    %v458 = vpop.f32.mrb[0].mxu0
    %v459 = vadd.f32 0.0, %v458
    %v460 = vpop.f32.mrb[0].mxu0
    %v461 = vpop.f32.mrb[0].mxu0
    %v462 = vadd.f32 0.0, %v461
    %v463 = vpop.f32.mrb[0].mxu0
    %464 = vmatprep.mubr.bf16.mxu0 0
    %465 = vmatmul.mubr.bf16.gmra.mrb[0].mxu0 %v229
    %v466 = vpop.f32.mrb[0].mxu0
    %v467 = vadd.f32 0.0, %v466
    %v468 = vpop.f32.mrb[0].mxu0
    %v469 = vpop.f32.mrb[0].mxu0
    %v470 = vadd.f32 0.0, %v469
    %v471 = vpop.f32.mrb[0].mxu0
    %472 = vmatprep.mubr.bf16.mxu0 0
    %473 = vmatmul.mubr.bf16.gmra.mrb[0].mxu0 %v230
    %v474 = vpop.f32.mrb[0].mxu0
    %v475 = vadd.f32 0.0, %v474
    %v476 = vpop.f32.mrb[0].mxu0
    %v477 = vpop.f32.mrb[0].mxu0
    %v478 = vadd.f32 0.0, %v477
    %v479 = vpop.f32.mrb[0].mxu0
    %480 = vmatprep.mubr.bf16.mxu0 0
    %481 = vmatmul.mubr.bf16.gmra.mrb[0].mxu0 %v231
    %v482 = vpop.f32.mrb[0].mxu0
    %v483 = vadd.f32 0.0, %v482
    %v484 = vpop.f32.mrb[0].mxu0
    %v485 = vpop.f32.mrb[0].mxu0
    %v486 = vadd.f32 0.0, %v485
    %v487 = vpop.f32.mrb[0].mxu0
    %488 = vmatprep.mubr.bf16.mxu0 0
    %489 = vmatmul.mubr.bf16.gmra.mrb[0].mxu0 %v232
    %v490 = vpop.f32.mrb[0].mxu0
    %v491 = vadd.f32 0.0, %v490
    %v492 = vpop.f32.mrb[0].mxu0
    %v493 = vpop.f32.mrb[0].mxu0
    %v494 = vadd.f32 0.0, %v493
    %v495 = vpop.f32.mrb[0].mxu0
    %496 = vmatprep.mubr.bf16.mxu0 0
    %497 = vmatmul.mubr.bf16.gmra.mrb[0].mxu0 %v233
    %v498 = vpop.f32.mrb[0].mxu0
    %v499 = vadd.f32 0.0, %v498
    %v500 = vpop.f32.mrb[0].mxu0
    %v501 = vpop.f32.mrb[0].mxu0
    %v502 = vadd.f32 0.0, %v501
    %v503 = vpop.f32.mrb[0].mxu0
    %504 = vmatprep.mubr.bf16.mxu0 0
    %505 = vmatmul.mubr.bf16.gmra.mrb[0].mxu0 %v234
    %v506 = vpop.f32.mrb[0].mxu0
    %v507 = vadd.f32 0.0, %v506
    %v508 = vpop.f32.mrb[0].mxu0
    %v509 = vpop.f32.mrb[0].mxu0
    %v510 = vadd.f32 0.0, %v509
    %v511 = vpop.f32.mrb[0].mxu0
    %512 = vmatprep.mubr.bf16.mxu0 0
    %513 = vmatmul.mubr.bf16.gmra.mrb[0].mxu0 %v235
    %v514 = vpop.f32.mrb[0].mxu0
    %v515 = vadd.f32 0.0, %v514
    %v516 = vpop.f32.mrb[0].mxu0
    %v517 = vpop.f32.mrb[0].mxu0
    %v518 = vadd.f32 0.0, %v517
    %v519 = vpop.f32.mrb[0].mxu0
    %520 = vmatprep.mubr.bf16.mxu0 0
    %521 = vmatmul.mubr.bf16.gmra.mrb[0].mxu0 %v236
    %v522 = vpop.f32.mrb[0].mxu0
    %v523 = vadd.f32 0.0, %v522
    %v524 = vpop.f32.mrb[0].mxu0
    %v525 = vpop.f32.mrb[0].mxu0
    %v526 = vadd.f32 0.0, %v525
    %v527 = vpop.f32.mrb[0].mxu0
    %528 = vmatprep.mubr.bf16.mxu0 0
    %529 = vmatmul.mubr.bf16.gmra.mrb[0].mxu0 %v237
    %v530 = vpop.f32.mrb[0].mxu0
    %v531 = vadd.f32 0.0, %v530
    %v532 = vpop.f32.mrb[0].mxu0
    %v533 = vpop.f32.mrb[0].mxu0
    %v534 = vadd.f32 0.0, %v533
    %v535 = vpop.f32.mrb[0].mxu0
    %536 = vmatprep.mubr.bf16.mxu0 0
    %537 = vmatmul.mubr.bf16.gmra.mrb[0].mxu0 %v238
    %v538 = vpop.f32.mrb[0].mxu0
    %v539 = vadd.f32 0.0, %v538
    %v540 = vpop.f32.mrb[0].mxu0
    %v541 = vpop.f32.mrb[0].mxu0
    %v542 = vpop.f32.mrb[0].mxu0
    %543 = vdwg.mxu0
    %544 = vst [vmem:[#allocation7] sm:$0xff] %v347
    %545 = vst [vmem:[#allocation7 + $0x8] sm:$0xff] %v350
    %546 = vst [vmem:[#allocation7 + $0x10] sm:$0xff] %v355
    %547 = vst [vmem:[#allocation7 + $0x18] sm:$0xff] %v358
    %548 = vst [vmem:[#allocation7 + $0x20] sm:$0xff] %v363
    %549 = vst [vmem:[#allocation7 + $0x28] sm:$0xff] %v366
    %550 = vst [vmem:[#allocation7 + $0x30] sm:$0xff] %v371
    %551 = vst [vmem:[#allocation7 + $0x38] sm:$0xff] %v374
    %552 = vst [vmem:[#allocation7 + $0x40] sm:$0xff] %v379
    %553 = vst [vmem:[#allocation7 + $0x48] sm:$0xff] %v382
    %554 = vst [vmem:[#allocation7 + $0x50] sm:$0xff] %v387
    %555 = vst [vmem:[#allocation7 + $0x58] sm:$0xff] %v390
    %556 = vst [vmem:[#allocation7 + $0x60] sm:$0xff] %v395
    %557 = vst [vmem:[#allocation7 + $0x68] sm:$0xff] %v398
    %558 = vst [vmem:[#allocation7 + $0x70] sm:$0xff] %v403
    %559 = vst [vmem:[#allocation7 + $0x78] sm:$0xff] %v406
    %560 = vst [vmem:[#allocation7 + $0x80] sm:$0xff] %v411
    %561 = vst [vmem:[#allocation7 + $0x88] sm:$0xff] %v414
    %562 = vst [vmem:[#allocation7 + $0x90] sm:$0xff] %v419
    %563 = vst [vmem:[#allocation7 + $0x98] sm:$0xff] %v422
    %564 = vst [vmem:[#allocation7 + $0xa0] sm:$0xff] %v427
    %565 = vst [vmem:[#allocation7 + $0xa8] sm:$0xff] %v430
    %566 = vst [vmem:[#allocation7 + $0xb0] sm:$0xff] %v435
    %567 = vst [vmem:[#allocation7 + $0xb8] sm:$0xff] %v438
    %568 = vst [vmem:[#allocation7 + $0xc0] sm:$0xff] %v443
    %569 = vst [vmem:[#allocation7 + $0xc8] sm:$0xff] %v446
    %570 = vst [vmem:[#allocation7 + $0xd0] sm:$0xff] %v451
    %571 = vst [vmem:[#allocation7 + $0xd8] sm:$0xff] %v454
    %572 = vst [vmem:[#allocation7 + $0xe0] sm:$0xff] %v459
    %573 = vst [vmem:[#allocation7 + $0xe8] sm:$0xff] %v462
    %574 = vst [vmem:[#allocation7 + $0xf0] sm:$0xff] %v467
    %575 = vst [vmem:[#allocation7 + $0xf8] sm:$0xff] %v470
    %576 = vst [vmem:[#allocation7 + $0x100] sm:$0xff] %v475
    %577 = vst [vmem:[#allocation7 + $0x108] sm:$0xff] %v478
    %578 = vst [vmem:[#allocation7 + $0x110] sm:$0xff] %v483
    %579 = vst [vmem:[#allocation7 + $0x118] sm:$0xff] %v486
    %580 = vst [vmem:[#allocation7 + $0x120] sm:$0xff] %v491
    %581 = vst [vmem:[#allocation7 + $0x128] sm:$0xff] %v494
    %582 = vst [vmem:[#allocation7 + $0x130] sm:$0xff] %v499
    %583 = vst [vmem:[#allocation7 + $0x138] sm:$0xff] %v502
    %584 = vst [vmem:[#allocation7 + $0x140] sm:$0xff] %v507
    %585 = vst [vmem:[#allocation7 + $0x148] sm:$0xff] %v510
    %586 = vst [vmem:[#allocation7 + $0x150] sm:$0xff] %v515
    %587 = vst [vmem:[#allocation7 + $0x158] sm:$0xff] %v518
    %588 = vst [vmem:[#allocation7 + $0x160] sm:$0xff] %v523
    %589 = vst [vmem:[#allocation7 + $0x168] sm:$0xff] %v526
    %590 = vst [vmem:[#allocation7 + $0x170] sm:$0xff] %v531
    %591 = vst [vmem:[#allocation7 + $0x178] sm:$0xff] %v534
    %592 = vst [vmem:[#allocation7 + $0x180] sm:$0xff] %v539
    %v593 = vld [vmem:[#allocation8] sm:$0x1]
    %v594 = vadd.f32 %v347, %v350
    %v595 = vadd.f32 %v594, %v355
    %v596 = vadd.f32 %v595, %v358
    %v597 = vadd.f32 %v596, %v363
    %v598 = vadd.f32 %v597, %v366
    %v599 = vadd.f32 %v598, %v371
    %v600 = vadd.f32 %v599, %v374
    %v601 = vadd.f32 %v600, %v379
    %v602 = vadd.f32 %v601, %v382
    %v603 = vadd.f32 %v602, %v387
    %v604 = vadd.f32 %v603, %v390
    %v605 = vadd.f32 %v604, %v395
    %v606 = vadd.f32 %v605, %v398
    %v607 = vadd.f32 %v606, %v403
    %v608 = vadd.f32 %v607, %v406
    %v609 = vadd.f32 %v608, %v411
    %v610 = vadd.f32 %v609, %v414
    %v611 = vadd.f32 %v610, %v419
    %v612 = vadd.f32 %v611, %v422
    %v613 = vadd.f32 %v612, %v427
    %v614 = vadd.f32 %v613, %v430
    %v615 = vadd.f32 %v614, %v435
    %v616 = vadd.f32 %v615, %v438
    %v617 = vadd.f32 %v616, %v443
    %v618 = vadd.f32 %v617, %v446
    %v619 = vadd.f32 %v618, %v451
    %v620 = vadd.f32 %v619, %v454
    %v621 = vadd.f32 %v620, %v459
    %v622 = vadd.f32 %v621, %v462
    %v623 = vadd.f32 %v622, %v467
    %v624 = vadd.f32 %v623, %v470
    %v625 = vadd.f32 %v624, %v475
    %v626 = vadd.f32 %v625, %v478
    %v627 = vadd.f32 %v626, %v483
    %v628 = vadd.f32 %v627, %v486
    %v629 = vadd.f32 %v628, %v491
    %v630 = vadd.f32 %v629, %v494
    %v631 = vadd.f32 %v630, %v499
    %v632 = vadd.f32 %v631, %v502
    %v633 = vadd.f32 %v632, %v507
    %v634 = vadd.f32 %v633, %v510
    %v635 = vadd.f32 %v634, %v515
    %v636 = vadd.f32 %v635, %v518
    %v637 = vadd.f32 %v636, %v523
    %v638 = vadd.f32 %v637, %v526
    %v639 = vadd.f32 %v638, %v531
    %v640 = vadd.f32 %v639, %v534
    %v641 = vadd.f32 %v640, %v539
    %v642 = vrot.slane %v641, 4
    %v643 = vadd.f32 %v641, %v642
    %v644 = vrot.slane %v643, 2
    %v645 = vadd.f32 %v643, %v644
    %v646 = vrot.slane %v645, 1
    %v647 = vadd.f32 %v645, %v646
    %v648 = vadd.f32 %v593, %v647
    %649 = vst [vmem:[#allocation8] sm:$0x1] %v648
    %v650 = vld [vmem:[#allocation10] sm:$0x1]
    %v651 = vmul.f32 %v347, %v347
    %v652 = vmul.f32 %v350, %v350
    %v653 = vmul.f32 %v355, %v355
    %v654 = vmul.f32 %v358, %v358
    %v655 = vmul.f32 %v363, %v363
    %v656 = vmul.f32 %v366, %v366
    %v657 = vmul.f32 %v371, %v371
    %v658 = vmul.f32 %v374, %v374
    %v659 = vmul.f32 %v379, %v379
    %v660 = vmul.f32 %v382, %v382
    %v661 = vmul.f32 %v387, %v387
    %v662 = vmul.f32 %v390, %v390
    %v663 = vmul.f32 %v395, %v395
    %v664 = vmul.f32 %v398, %v398
    %v665 = vmul.f32 %v403, %v403
    %v666 = vmul.f32 %v406, %v406
    %v667 = vmul.f32 %v411, %v411
    %v668 = vmul.f32 %v414, %v414
    %v669 = vmul.f32 %v419, %v419
    %v670 = vmul.f32 %v422, %v422
    %v671 = vmul.f32 %v427, %v427
    %v672 = vmul.f32 %v430, %v430
    %v673 = vmul.f32 %v435, %v435
    %v674 = vmul.f32 %v438, %v438
    %v675 = vmul.f32 %v443, %v443
    %v676 = vmul.f32 %v446, %v446
    %v677 = vmul.f32 %v451, %v451
    %v678 = vmul.f32 %v454, %v454
    %v679 = vmul.f32 %v459, %v459
    %v680 = vmul.f32 %v462, %v462
    %v681 = vmul.f32 %v467, %v467
    %v682 = vmul.f32 %v470, %v470
    %v683 = vmul.f32 %v475, %v475
    %v684 = vmul.f32 %v478, %v478
    %v685 = vmul.f32 %v483, %v483
    %v686 = vmul.f32 %v486, %v486
    %v687 = vmul.f32 %v491, %v491
    %v688 = vmul.f32 %v494, %v494
    %v689 = vmul.f32 %v499, %v499
    %v690 = vmul.f32 %v502, %v502
    %v691 = vmul.f32 %v507, %v507
    %v692 = vmul.f32 %v510, %v510
    %v693 = vmul.f32 %v515, %v515
    %v694 = vmul.f32 %v518, %v518
    %v695 = vmul.f32 %v523, %v523
    %v696 = vmul.f32 %v526, %v526
    %v697 = vmul.f32 %v531, %v531
    %v698 = vmul.f32 %v534, %v534
    %v699 = vmul.f32 %v539, %v539
    %v700 = vadd.f32 %v651, %v652
    %v701 = vadd.f32 %v700, %v653
    %v702 = vadd.f32 %v701, %v654
    %v703 = vadd.f32 %v702, %v655
    %v704 = vadd.f32 %v703, %v656
    %v705 = vadd.f32 %v704, %v657
    %v706 = vadd.f32 %v705, %v658
    %v707 = vadd.f32 %v706, %v659
    %v708 = vadd.f32 %v707, %v660
    %v709 = vadd.f32 %v708, %v661
    %v710 = vadd.f32 %v709, %v662
    %v711 = vadd.f32 %v710, %v663
    %v712 = vadd.f32 %v711, %v664
    %v713 = vadd.f32 %v712, %v665
    %v714 = vadd.f32 %v713, %v666
    %v715 = vadd.f32 %v714, %v667
    %v716 = vadd.f32 %v715, %v668
    %v717 = vadd.f32 %v716, %v669
    %v718 = vadd.f32 %v717, %v670
    %v719 = vadd.f32 %v718, %v671
    %v720 = vadd.f32 %v719, %v672
    %v721 = vadd.f32 %v720, %v673
    %v722 = vadd.f32 %v721, %v674
    %v723 = vadd.f32 %v722, %v675
    %v724 = vadd.f32 %v723, %v676
    %v725 = vadd.f32 %v724, %v677
    %v726 = vadd.f32 %v725, %v678
    %v727 = vadd.f32 %v726, %v679
    %v728 = vadd.f32 %v727, %v680
    %v729 = vadd.f32 %v728, %v681
    %v730 = vadd.f32 %v729, %v682
    %v731 = vadd.f32 %v730, %v683
    %v732 = vadd.f32 %v731, %v684
    %v733 = vadd.f32 %v732, %v685
    %v734 = vadd.f32 %v733, %v686
    %v735 = vadd.f32 %v734, %v687
    %v736 = vadd.f32 %v735, %v688
    %v737 = vadd.f32 %v736, %v689
    %v738 = vadd.f32 %v737, %v690
    %v739 = vadd.f32 %v738, %v691
    %v740 = vadd.f32 %v739, %v692
    %v741 = vadd.f32 %v740, %v693
    %v742 = vadd.f32 %v741, %v694
    %v743 = vadd.f32 %v742, %v695
    %v744 = vadd.f32 %v743, %v696
    %v745 = vadd.f32 %v744, %v697
    %v746 = vadd.f32 %v745, %v698
    %v747 = vadd.f32 %v746, %v699
    %v748 = vrot.slane %v747, 4
    %v749 = vadd.f32 %v747, %v748
    %v750 = vrot.slane %v749, 2
    %v751 = vadd.f32 %v749, %v750
    %v752 = vrot.slane %v751, 1
    %v753 = vadd.f32 %v751, %v752
    %v754 = vadd.f32 %v650, %v753
    %755 = vst [vmem:[#allocation10] sm:$0x1] %v754
    // Predicated region
    $region22: #{tpu_custom_call.1} parent=1 // pred_check
      _
    $region23: #{tpu_custom_call.1} parent=1 // pred_check_branch
      %757 = sbr.rel (0) target = $region25
    $region24: #{tpu_custom_call.1} parent=1 // pred_region
      %s759 = ssub.s32 6272, 6272
      %760 = vsyncadd [#allocation4], %s759
      %s761 = sshll.u32 [#allocation7], 4
      %s762 = int_to_ptr.vmem [resolvable:$true] %s761
      %767 = dma.vmem_to_hbm [thread:$0]  %s762, 6272, %s2, [#allocation4], 128, 128, 8
    $region25: #{tpu_custom_call.1} parent=1 // pred_fallthru
      _
    // Predicated region
    $region26: #{tpu_custom_call.1} parent=1 // pred_check
      _
    $region27: #{tpu_custom_call.1} parent=1 // pred_check_branch
      %769 = sbr.rel (0) target = $region29
    $region28: #{tpu_custom_call.1} parent=1 // pred_region
      %s771 = ssub.s32 16, 16
      %772 = vsyncadd [#allocation9], %s771
      %s774 = sshll.u32 [#allocation8], 4
      %s775 = int_to_ptr.vmem [resolvable:$true] %s774
      %777 = dma.vmem_to_hbm [thread:$0]  %s775, 16, %s3, [#allocation9]
    $region29: #{tpu_custom_call.1} parent=1 // pred_fallthru
      _
    // Predicated region
    $region30: #{tpu_custom_call.1} parent=1 // pred_check
      _
    $region31: #{tpu_custom_call.1} parent=1 // pred_check_branch
      %779 = sbr.rel (0) target = $region33
    $region32: #{tpu_custom_call.1} parent=1 // pred_region
      %s781 = ssub.s32 16, 16
      %782 = vsyncadd [#allocation9], %s781
      %s784 = sshll.u32 [#allocation10], 4
      %s785 = int_to_ptr.vmem [resolvable:$true] %s784
      %787 = dma.vmem_to_hbm [thread:$0]  %s785, 16, %s4, [#allocation9]
    $region33: #{tpu_custom_call.1} parent=1 // pred_fallthru
      _
    // Predicated region
    $region34: #{tpu_custom_call.1} parent=1 // pred_check
      _
    $region35: #{tpu_custom_call.1} parent=1 // pred_check_branch
      %789 = sbr.rel (0) target = $region37
    $region36: #{tpu_custom_call.1} parent=1 // pred_region
      %790 = dma.done [#allocation4], 6272
    $region37: #{tpu_custom_call.1} parent=1 // pred_fallthru
      _
    // Predicated region
    $region38: #{tpu_custom_call.1} parent=1 // pred_check
      _
    $region39: #{tpu_custom_call.1} parent=1 // pred_check_branch
      %792 = sbr.rel (0) target = $region41
    $region40: #{tpu_custom_call.1} parent=1 // pred_region
      %793 = dma.done [#allocation9], 16
    $region41: #{tpu_custom_call.1} parent=1 // pred_fallthru
      _
    // Predicated region
    $region42: #{tpu_custom_call.1} parent=1 // pred_check
      _
    $region43: #{tpu_custom_call.1} parent=1 // pred_check_branch
      %795 = sbr.rel (0) target = $region45
    $region44: #{tpu_custom_call.1} parent=1 // pred_region
      %796 = dma.done [#allocation9], 16
    $region45: #{tpu_custom_call.1} parent=1 // pred_fallthru
      _
    %797 = vsyncpa [#allocation3], 1
    %798 = vsyncpa [#allocation6], 1
    %799 = vsyncpa [#allocation4], 1
    %800 = vsyncpa [#allocation9], 1

</llo_original>
